<compile_context>
chip_gen: v6e
topology: v6e:2x2x1
jax: 0.10.0
libtpu: 0.0.40
codegen_flags: <defaults>
</compile_context>

<pallas_src>
import functools

import jax
import jax.numpy as jnp
from jax.experimental import pallas as pl
from jax.experimental.pallas import tpu as pltpu

EPS = 1e-5


def _round_up(x, m):
    return (x + m - 1) // m * m


# --------------------------------------------------------------------------- #
# Kernel: one row-tile of the fused (3x3 | 1x1) matmul + ReLU + ReLU + add.
# --------------------------------------------------------------------------- #
def feedforward_kernel(p_ref, w_ref, o_ref):
    # p_ref : (TM, Kp)     im2col patch rows + constant-1 bias column (compute dtype)
    # w_ref : (Kp, 2*Cp)   [ folded 3x3 weights + bias row | folded 1x1 @ centre tap + bias row ]
    # o_ref : (TM, Cp)     compute dtype
    cp = o_ref.shape[1]
    acc = jnp.dot(p_ref[...], w_ref[...],
                  preferred_element_type=jnp.float32)      # one MXU pass, (TM, 2*Cp)
    y3 = jnp.maximum(acc[:, :cp], 0.0)                      # conv3x3 -> BN -> ReLU (bias in matmul)
    y1 = jnp.maximum(acc[:, cp:], 0.0)                      # conv1x1 -> BN -> ReLU (bias in matmul)
    o_ref[...] = (y3 + y1).astype(o_ref.dtype)              # x_conv(x) + conv(x)


def fold_bn(w, b, gamma, beta, mean, var, eps=EPS):
    """Fold eval-mode BatchNorm into a conv weight (..., Cout) / bias (Cout,)."""
    scale = gamma / jnp.sqrt(var + eps)
    return w * scale, (b - mean) * scale + beta


@functools.partial(jax.jit, static_argnames=("compute_dtype", "tile_rows"))
def feedforward_pallas(x_nchw, params, compute_dtype=jnp.bfloat16, tile_rows=None):
    """x_nchw: (N, Cin, H, W) float32 -> (N, Cout, H, W) in compute_dtype."""
    N, Cin, H, W = x_nchw.shape
    Cout = params["w3"].shape[0]

    K = 9 * Cin
    Kp = _round_up(K + 1, 128)       # +1 row for the constant-1 bias column, lane-dense
    Cp = _round_up(Cout, 128)        # lane-dense output width
    R0 = N * H * W

    # Adaptive row tile: amortize per-grid-step overhead (large TM) while
    # keeping >= ~8 grid steps so dimension_semantics=("parallel",) can still
    # shard rows across TensorCores (v7x).  256 <= TM <= 2048, multiple of 256.
    if tile_rows is None:
        TM = _round_up(pl.cdiv(R0, 8), 256)
        TM = max(256, min(TM, 2048))
    else:
        TM = tile_rows
    R = _round_up(R0, TM)

    # ---- glue (fused by XLA under jit): NCHW->NHWC, zero-pad, im2col,
    #      bias column, lane/row padding, cast to compute dtype.
    x = jnp.transpose(x_nchw, (0, 2, 3, 1))                          # (N,H,W,Cin)
    x_pad = jnp.pad(x, ((0, 0), (1, 1), (1, 1), (0, 0)))
    taps = [x_pad[:, dy:dy + H, dx:dx + W, :]
            for dy in range(3) for dx in range(3)]
    patches = jnp.concatenate(taps, axis=-1).reshape(R0, K)          # (R0, 9*Cin)
    patches = jnp.concatenate(
        [patches, jnp.ones((R0, 1), patches.dtype)], axis=-1)        # bias column at row K
    patches = jnp.pad(patches, ((0, R - R0), (0, Kp - (K + 1))))
    patches = patches.astype(compute_dtype)

    # ---- fold BN (in f32), pack both branches + biases into one (Kp, 2*Cp) ----
    w3 = jnp.transpose(params["w3"], (2, 3, 1, 0))                   # (3,3,Cin,Cout)
    w3f, b3f = fold_bn(w3, params["b3"], params["g3"], params["be3"],
                       params["m3"], params["v3"])
    w1 = jnp.transpose(params["w1"][:, :, 0, 0], (1, 0))             # (Cin,Cout)
    w1f, b1f = fold_bn(w1, params["b1"], params["g1"], params["be1"],
                       params["m1"], params["v1"])

    w_packed = jnp.zeros((Kp, 2 * Cp), jnp.float32)
    w_packed = w_packed.at[:K, :Cout].set(w3f.reshape(K, Cout))
    w_packed = w_packed.at[K, :Cout].set(b3f)                        # 3x3-branch bias row
    ctr = 4 * Cin                                                    # centre tap (dy=1,dx=1)
    w_packed = w_packed.at[ctr:ctr + Cin, Cp:Cp + Cout].set(w1f)
    w_packed = w_packed.at[K, Cp:Cp + Cout].set(b1f)                 # 1x1-branch bias row
    w_packed = w_packed.astype(compute_dtype)

    itemsize = jnp.dtype(compute_dtype).itemsize
    flops = 2 * R * Kp * (2 * Cp)
    bytes_accessed = (R * Kp + Kp * 2 * Cp + R * Cp) * itemsize

    # Double-buffered patches + output tiles, double-buffered (grid-invariant)
    # packed weight; capped at 64 MiB so the limit is valid on v7x and lifts
    # the 16 MiB v5e default when channels scale up.
    vmem_need = (2 * TM * Kp + 2 * TM * Cp + 2 * Kp * 2 * Cp) * itemsize
    vmem_limit = int(min(64 * 1024 * 1024, max(32 * 1024 * 1024, 2 * vmem_need)))

    out2d = pl.pallas_call(
        feedforward_kernel,
        out_shape=jax.ShapeDtypeStruct((R, Cp), compute_dtype),
        grid_spec=pltpu.PrefetchScalarGridSpec(
            num_scalar_prefetch=0,
            grid=(R // TM,),
            in_specs=[
                pl.BlockSpec((TM, Kp), lambda r: (r, 0)),        # row tile of patches
                pl.BlockSpec((Kp, 2 * Cp), lambda r: (0, 0)),    # packed weights (resident)
            ],
            out_specs=pl.BlockSpec((TM, Cp), lambda r: (r, 0)),
        ),
        compiler_params=pltpu.CompilerParams(
            dimension_semantics=("parallel",),
            vmem_limit_bytes=vmem_limit),
        cost_estimate=pl.CostEstimate(
            flops=flops, transcendentals=0, bytes_accessed=bytes_accessed),
    )(patches, w_packed)

    out = out2d[:R0, :Cout].reshape(N, H, W, Cout)
    return jnp.transpose(out, (0, 3, 1, 2))                          # back to NCHW


# --------------------------------------------------------------------------- #
# Pure-JAX reference (eval-mode BatchNorm), NCHW.
# --------------------------------------------------------------------------- #
def feedforward_ref(x_nchw, params):
    def bn_relu(y, g, be, m, v):
        g = g.reshape(1, -1, 1, 1); be = be.reshape(1, -1, 1, 1)
        m = m.reshape(1, -1, 1, 1); v = v.reshape(1, -1, 1, 1)
        return jnp.maximum(g * (y - m) / jnp.sqrt(v + EPS) + be, 0.0)

    y3 = jax.lax.conv_general_dilated(
        x_nchw, params["w3"], window_strides=(1, 1), padding=((1, 1), (1, 1)),
        dimension_numbers=("NCHW", "OIHW", "NCHW"))
    y3 = y3 + params["b3"].reshape(1, -1, 1, 1)
    y3 = bn_relu(y3, params["g3"], params["be3"], params["m3"], params["v3"])

    y1 = jax.lax.conv_general_dilated(
        x_nchw, params["w1"], window_strides=(1, 1), padding=((0, 0), (0, 0)),
        dimension_numbers=("NCHW", "OIHW", "NCHW"))
    y1 = y1 + params["b1"].reshape(1, -1, 1, 1)
    y1 = bn_relu(y1, params["g1"], params["be1"], params["m1"], params["v1"])
    return y1 + y3


def make_params(key, in_dim, out_dim):
    ks = jax.random.split(key, 8)
    return {
        # conv_relu_bn branch: Conv2d(in,out,3,pad=1,dil=1) -> BN -> ReLU
        "w3": 0.1 * jax.random.normal(ks[0], (out_dim, in_dim, 3, 3), jnp.float32),
        "b3": 0.1 * jax.random.normal(ks[1], (out_dim,), jnp.float32),
        "g3": 1.0 + 0.1 * jax.random.normal(ks[2], (out_dim,), jnp.float32),
        "be3": 0.1 * jax.random.normal(ks[3], (out_dim,), jnp.float32),
        "m3": 0.1 * jax.random.normal(ks[4], (out_dim,), jnp.float32),
        "v3": jnp.abs(1.0 + 0.1 * jax.random.normal(ks[5], (out_dim,), jnp.float32)),
        # x_conv branch: Conv2d(in,out,1) -> BN -> ReLU
        "w1": 0.1 * jax.random.normal(ks[6], (out_dim, in_dim, 1, 1), jnp.float32),
        "b1": 0.1 * jax.random.normal(ks[7], (out_dim,), jnp.float32),
        "g1": jnp.ones((out_dim,), jnp.float32),
        "be1": jnp.zeros((out_dim,), jnp.float32),
        "m1": jnp.zeros((out_dim,), jnp.float32),
        "v1": jnp.ones((out_dim,), jnp.float32),
    }


if __name__ == "__main__":
    key = jax.random.PRNGKey(0)
    kx, kp = jax.random.split(key)

    N, Cin, Cout, H, W = 2, 4, 8, 16, 16
    x = jax.random.normal(kx, (N, Cin, H, W), jnp.float32)
    params = make_params(kp, Cin, Cout)

    ref = feedforward_ref(x, params)

    # f32 path: tight numerical check of the fused-matmul kernel.
    out_f32 = jax.block_until_ready(
        feedforward_pallas(x, params, compute_dtype=jnp.float32))
    assert out_f32.shape == (N, Cout, H, W)
    assert jnp.allclose(out_f32, ref, atol=1e-4, rtol=1e-4), (
        float(jnp.max(jnp.abs(out_f32 - ref))))

    # bf16 path (default; bf16 in / bf16 out): looser tolerance for the casts.
    out_bf16 = jax.block_until_ready(feedforward_pallas(x, params))
    assert out_bf16.shape == (N, Cout, H, W)
    out_bf16_f32 = out_bf16.astype(jnp.float32)
    assert jnp.allclose(out_bf16_f32, ref, atol=5e-2, rtol=5e-2), (
        float(jnp.max(jnp.abs(out_bf16_f32 - ref))))

    print("KERNEL_OK")
</pallas_src>

<mosaic_0001>
module attributes {stable_mosaic.version = 11 : i64} {
  func.func @feedforward_kernel(%arg0: i32, %arg1: memref<256x128xf32, #tpu.memory_space<vmem>>, %arg2: memref<128x256xf32, #tpu.memory_space<vmem>>, %arg3: memref<256x128xf32, #tpu.memory_space<vmem>>) attributes {dimension_semantics = [#tpu.dimension_semantics<parallel>], iteration_bounds = array<i64: 2>, scalar_prefetch = 0 : i64, scratch_operands = 0 : i64, tpu.core_type = #tpu.core_type<tc>, window_params = [{transform_indices = @transform_0, window_bounds = array<i64: 256, 128>}, {pipeline_mode = #tpu.pipeline_mode<synchronous>, transform_indices = @transform_1, window_bounds = array<i64: 128, 256>}, {transform_indices = @transform_2, window_bounds = array<i64: 256, 128>}]} {
    %c0 = arith.constant 0 : index
    %c0_0 = arith.constant 0 : index
    %0 = vector.load %arg1[%c0, %c0_0] : memref<256x128xf32, #tpu.memory_space<vmem>>, vector<256x128xf32>
    %c0_1 = arith.constant 0 : index
    %c0_2 = arith.constant 0 : index
    %1 = vector.load %arg2[%c0_1, %c0_2] : memref<128x256xf32, #tpu.memory_space<vmem>>, vector<128x256xf32>
    %cst = arith.constant dense<0.000000e+00> : vector<256x256xf32>
    %2 = tpu.matmul %0, %1, %cst {dimension_numbers = #tpu.dot_dimension_numbers<[1], [0], [0], [1], [0, 0, 1, 1], [], []>} : vector<256x128xf32>, vector<128x256xf32>, vector<256x256xf32> -> vector<256x256xf32>
    %3 = vector.extract_strided_slice %2 {offsets = [0, 0], sizes = [256, 128], strides = [1, 1]} : vector<256x256xf32> to vector<256x128xf32>
    %cst_3 = arith.constant 0.000000e+00 : f32
    %4 = vector.broadcast %cst_3 : f32 to vector<256x128xf32>
    %5 = arith.maximumf %3, %4 : vector<256x128xf32>
    %6 = vector.extract_strided_slice %2 {offsets = [0, 128], sizes = [256, 128], strides = [1, 1]} : vector<256x256xf32> to vector<256x128xf32>
    %cst_4 = arith.constant 0.000000e+00 : f32
    %7 = vector.broadcast %cst_4 : f32 to vector<256x128xf32>
    %8 = arith.maximumf %6, %7 : vector<256x128xf32>
    %9 = arith.addf %5, %8 : vector<256x128xf32>
    %c0_5 = arith.constant 0 : index
    %c0_6 = arith.constant 0 : index
    %10 = vector.load %arg3[%c0_5, %c0_6] : memref<256x128xf32, #tpu.memory_space<vmem>>, vector<256x128xf32>
    tpu.vector_store %arg3[%c0_5, %c0_6], %9 {strides = array<i32>} : memref<256x128xf32, #tpu.memory_space<vmem>>, vector<256x128xf32>,
    return
  }
  func.func @transform_0(%arg0: i32) -> (i32, i32) {
    %c0_i32 = arith.constant 0 : i32
    %c0_i32_0 = arith.constant 0 : i32
    return %arg0, %c0_i32 : i32, i32
  }
  func.func @transform_1(%arg0: i32) -> (i32, i32) {
    %c0_i32 = arith.constant 0 : i32
    %c0_i32_0 = arith.constant 0 : i32
    %c0_i32_1 = arith.constant 0 : i32
    return %c0_i32, %c0_i32_0 : i32, i32
  }
  func.func @transform_2(%arg0: i32) -> (i32, i32) {
    %c0_i32 = arith.constant 0 : i32
    %c0_i32_0 = arith.constant 0 : i32
    return %arg0, %c0_i32 : i32, i32
  }
}

</mosaic_0001>

<llo_original>
// kernel: feedforward_pallas.1
$region0: #{feedforward_pallas.1}
  #allocation0 [shape = 'u32[]', space=smem, size = 0x4, offset = 0x4, fixed_abs, tag = 'smem constant byte address 0x4 - core index']
  #allocation1 [shape = 'u32[144,128]{1,0:T(1,128)}', space=vmem, size = 0x12000, scoped, tag = 'internal scratch']
  %s0 = inlined_call_operand.vmem [shape: f32[512,128], index: 0, kind: input, shape index: {}]
  %s1 = inlined_call_operand.vmem [shape: f32[128,256], index: 1, kind: input, shape index: {}]
  %s2 = inlined_call_operand.vmem [shape: f32[512,128], index: 2, kind: output, shape index: {}]
  %s3 = sld [smem:[#allocation0]]
  $region41: #{feedforward_pallas.1} parent=0
    _
  %s5 = ssub.s32 1, %s3
  %s6 = scalar_select 0, %s5, %s3
  loop: start=0, step=1, limit=4
  $region2: #{feedforward_pallas.1} parent=0 // loop_pre_header
    _
  $region3: #{feedforward_pallas.1} parent=0 // loop_header
    %s8 = sphi 0, %s12
    %p9 = scmp.ge.s32.totalorder %s8, 4
    %s18 = sphi 0, %s20
    %s21 = sphi 0, %s18
    %s22 = sphi 0, %s21
    %s38 = sphi 0, %s22
    %s42 = sphi 0, %s42
    %s44 = sphi 0, %s42
    %s45 = sphi 0, %s44
    %s59 = sphi 0, %s45
    %s65 = sphi 0, %s67
    %s68 = sphi 0, %s65
    %s69 = sphi 0, %s68
    %s85 = sphi 0, %s69
  $region4: #{feedforward_pallas.1} parent=0 // loop_header_branch
    %11 = sbr.rel (%p9) target = $region8
  $region5: #{feedforward_pallas.1} parent=0 // loop_body
    %s13 = ssub.s32 %s8, 1
    %s14 = ssub.s32 %s8, 2
    %s15 = sadd.s32 %s8, 1
    %s16 = ssub.s32 %s8, %s15
    %p17 = scmp.eq.s32.totalorder %s16, 0
    %s19 = sadd.s32 %s18, 1
    %s20 = scalar_select %p17, %s18, %s19
    %p23 = pneg %p17
    %p24 = scmp.eq.s32.totalorder %s8, 1
    %p25 = por %p23, %p24
    %p26 = scmp.ne.s32.totalorder %s18, %s21
    %p27 = scmp.eq.s32.totalorder %s8, 0
    %p28 = por %p26, %p27
    %p29 = scmp.ne.s32.totalorder %s18, %s21
    %p30 = scmp.eq.s32.totalorder %s13, 1
    %p31 = por %p29, %p30
    %p32 = scmp.ne.s32.totalorder %s21, %s22
    %p33 = scmp.eq.s32.totalorder %s13, 0
    %p34 = por %p32, %p33
    %p35 = scmp.ne.s32.totalorder %s21, %s22
    %p36 = scmp.eq.s32.totalorder %s14, 1
    %p37 = por %p35, %p36
    %p39 = scmp.ne.s32.totalorder %s22, %s38
    %p40 = scmp.eq.s32.totalorder %s14, 0
    %p41 = por %p39, %p40
    %s43 = sadd.s32 %s42, 1
    %p46 = scmp.eq.s32.totalorder %s8, 1
    %p47 = scmp.ne.s32.totalorder %s42, %s44
    %p48 = scmp.eq.s32.totalorder %s8, 0
    %p49 = por %p47, %p48
    %p50 = scmp.ne.s32.totalorder %s42, %s44
    %p51 = scmp.eq.s32.totalorder %s13, 1
    %p52 = por %p50, %p51
    %p53 = scmp.ne.s32.totalorder %s44, %s45
    %p54 = scmp.eq.s32.totalorder %s13, 0
    %p55 = por %p53, %p54
    %p56 = scmp.ne.s32.totalorder %s44, %s45
    %p57 = scmp.eq.s32.totalorder %s14, 1
    %p58 = por %p56, %p57
    %p60 = scmp.ne.s32.totalorder %s45, %s59
    %p61 = scmp.eq.s32.totalorder %s14, 0
    %p62 = por %p60, %p61
    %s63 = ssub.s32 %s8, %s15
    %p64 = scmp.eq.s32.totalorder %s63, 0
    %s66 = sadd.s32 %s65, 1
    %s67 = scalar_select %p64, %s65, %s66
    %p70 = pneg %p64
    %p71 = scmp.eq.s32.totalorder %s8, 1
    %p72 = por %p70, %p71
    %p73 = scmp.ne.s32.totalorder %s65, %s68
    %p74 = scmp.eq.s32.totalorder %s8, 0
    %p75 = por %p73, %p74
    %p76 = scmp.ne.s32.totalorder %s65, %s68
    %p77 = scmp.eq.s32.totalorder %s13, 1
    %p78 = por %p76, %p77
    %p79 = scmp.ne.s32.totalorder %s68, %s69
    %p80 = scmp.eq.s32.totalorder %s13, 0
    %p81 = por %p79, %p80
    %p82 = scmp.ne.s32.totalorder %s68, %s69
    %p83 = scmp.eq.s32.totalorder %s14, 1
    %p84 = por %p82, %p83
    %p86 = scmp.ne.s32.totalorder %s69, %s85
    %p87 = scmp.eq.s32.totalorder %s14, 0
    %p88 = por %p86, %p87
    %p89 = scmp.le.s32.totalorder 1, %s8
    %p90 = scmp.lt.s32.totalorder %s8, 3
    %p91 = pnand %p89, %p90
    %p92 = pneg %p91
    // Predicated region
    $region9: #{feedforward_pallas.1} parent=5 // pred_check
      _
    $region10: #{feedforward_pallas.1} parent=5 // pred_check_branch
      %94 = sbr.rel (%p91) target = $region12
    $region11: #{feedforward_pallas.1} parent=5 // pred_region
      %s95 = ssub.s32 %s8, 1
      // Predicated region
      $region13: #{feedforward_pallas.1} parent=11 // pred_check
        %p96 = pneg %p55
      $region14: #{feedforward_pallas.1} parent=11 // pred_check_branch
        %98 = sbr.rel (%p96) target = $region16
      $region15: #{feedforward_pallas.1} parent=11 // pred_region
        _
      $region16: #{feedforward_pallas.1} parent=11 // pred_fallthru
        _
    $region12: #{feedforward_pallas.1} parent=5 // pred_fallthru
      _
    %p99 = scmp.lt.s32.totalorder %s8, 2
    // Predicated region
    $region17: #{feedforward_pallas.1} parent=5 // pred_check
      %p100 = pneg %p99
    $region18: #{feedforward_pallas.1} parent=5 // pred_check_branch
      %102 = sbr.rel (%p100) target = $region20
    $region19: #{feedforward_pallas.1} parent=5 // pred_region
      // Predicated region
      $region21: #{feedforward_pallas.1} parent=19 // pred_check
        %p103 = pneg %p28
      $region22: #{feedforward_pallas.1} parent=19 // pred_check_branch
        %105 = sbr.rel (%p103) target = $region24
      $region23: #{feedforward_pallas.1} parent=19 // pred_region
        %s106 = smul.u32 32, %s8
        %p107 = scmp.lt.s32.totalorder %s106, 63
        %s108 = scalar_select %p107, %s106, 63
        %s109 = smul.addr %s108, 8
        %s110 = scalar_lea.vmem %s0, %s109
        %s111 = smul.u32 32, %s8
      $region24: #{feedforward_pallas.1} parent=19 // pred_fallthru
        _
    $region20: #{feedforward_pallas.1} parent=5 // pred_fallthru
      _
    %p112 = scmp.le.s32.totalorder 1, %s8
    %p113 = scmp.lt.s32.totalorder %s8, 3
    %p114 = pnand %p112, %p113
    %p115 = pneg %p114
    // Predicated region
    $region25: #{feedforward_pallas.1} parent=5 // pred_check
      _
    $region26: #{feedforward_pallas.1} parent=5 // pred_check_branch
      %117 = sbr.rel (%p114) target = $region28
    $region27: #{feedforward_pallas.1} parent=5 // pred_region
      %s118 = ssub.s32 %s8, 1
      %s119 = smul.u32 32, %s13
      %p120 = scmp.lt.s32.totalorder %s119, 63
      %s121 = scalar_select %p120, %s119, 63
      %s122 = smul.addr %s121, 8
      %s123 = scalar_lea.vmem %s0, %s122
      %p124 = pneg %p34
      %p125 = pneg %p31
      %p126 = pneg %p55
      %p127 = pneg %p52
      %p128 = pneg %p81
      %p129 = pneg %p78
      %s130 = smul.u32 32, %s13
      %p131 = scmp.lt.s32.totalorder %s130, 63
      %s132 = scalar_select %p131, %s130, 63
      %s133 = smul.addr %s132, 8
      %s134 = scalar_lea.vmem %s2, %s133
      %s135 = smul.u32 32, %s13
      %p136 = scmp.lt.s32.totalorder %s135, 63
      %s137 = scalar_select %p136, %s135, 63
      %s138 = smul.addr %s137, 8
      %s139 = scalar_lea.vmem %s0, %s138
      %s140 = smul.u32 32, %s13
      %s141 = smul.u32 32, %s13
      %p142 = scmp.lt.s32.totalorder %s141, 63
      %s143 = scalar_select %p142, %s141, 63
      %s144 = smul.addr %s143, 8
      %s145 = scalar_lea.vmem %s2, %s144
      %s146 = smul.u32 32, %s13
      %v147 = vld [vmem:[%s139] sm:$0xff]
      %v148 = vld [vmem:[%s139 + $0x8] sm:$0xff]
      %v149 = vld [vmem:[%s139 + $0x10] sm:$0xff]
      %v150 = vld [vmem:[%s139 + $0x18] sm:$0xff]
      %v151 = vld [vmem:[%s139 + $0x20] sm:$0xff]
      %v152 = vld [vmem:[%s139 + $0x28] sm:$0xff]
      %v153 = vld [vmem:[%s139 + $0x30] sm:$0xff]
      %v154 = vld [vmem:[%s139 + $0x38] sm:$0xff]
      %v155 = vld [vmem:[%s139 + $0x40] sm:$0xff]
      %v156 = vld [vmem:[%s139 + $0x48] sm:$0xff]
      %v157 = vld [vmem:[%s139 + $0x50] sm:$0xff]
      %v158 = vld [vmem:[%s139 + $0x58] sm:$0xff]
      %v159 = vld [vmem:[%s139 + $0x60] sm:$0xff]
      %v160 = vld [vmem:[%s139 + $0x68] sm:$0xff]
      %v161 = vld [vmem:[%s139 + $0x70] sm:$0xff]
      %v162 = vld [vmem:[%s139 + $0x78] sm:$0xff]
      %v163 = vld [vmem:[%s139 + $0x80] sm:$0xff]
      %v164 = vld [vmem:[%s139 + $0x88] sm:$0xff]
      %v165 = vld [vmem:[%s139 + $0x90] sm:$0xff]
      %v166 = vld [vmem:[%s139 + $0x98] sm:$0xff]
      %v167 = vld [vmem:[%s139 + $0xa0] sm:$0xff]
      %v168 = vld [vmem:[%s139 + $0xa8] sm:$0xff]
      %v169 = vld [vmem:[%s139 + $0xb0] sm:$0xff]
      %v170 = vld [vmem:[%s139 + $0xb8] sm:$0xff]
      %v171 = vld [vmem:[%s139 + $0xc0] sm:$0xff]
      %v172 = vld [vmem:[%s139 + $0xc8] sm:$0xff]
      %v173 = vld [vmem:[%s139 + $0xd0] sm:$0xff]
      %v174 = vld [vmem:[%s139 + $0xd8] sm:$0xff]
      %v175 = vld [vmem:[%s139 + $0xe0] sm:$0xff]
      %v176 = vld [vmem:[%s139 + $0xe8] sm:$0xff]
      %v177 = vld [vmem:[%s139 + $0xf0] sm:$0xff]
      %v178 = vld [vmem:[%s139 + $0xf8] sm:$0xff]
      %v179 = vld [vmem:[%s1] sm:$0xff]
      %v180 = vld [vmem:[%s1 + $0x8] sm:$0xff]
      %v181 = vld [vmem:[%s1 + $0x10] sm:$0xff]
      %v182 = vld [vmem:[%s1 + $0x18] sm:$0xff]
      %v183 = vld [vmem:[%s1 + $0x20] sm:$0xff]
      %v184 = vld [vmem:[%s1 + $0x28] sm:$0xff]
      %v185 = vld [vmem:[%s1 + $0x30] sm:$0xff]
      %v186 = vld [vmem:[%s1 + $0x38] sm:$0xff]
      %v187 = vld [vmem:[%s1 + $0x40] sm:$0xff]
      %v188 = vld [vmem:[%s1 + $0x48] sm:$0xff]
      %v189 = vld [vmem:[%s1 + $0x50] sm:$0xff]
      %v190 = vld [vmem:[%s1 + $0x58] sm:$0xff]
      %v191 = vld [vmem:[%s1 + $0x60] sm:$0xff]
      %v192 = vld [vmem:[%s1 + $0x68] sm:$0xff]
      %v193 = vld [vmem:[%s1 + $0x70] sm:$0xff]
      %v194 = vld [vmem:[%s1 + $0x78] sm:$0xff]
      %v195 = vld [vmem:[%s1 + $0x80] sm:$0xff]
      %v196 = vld [vmem:[%s1 + $0x88] sm:$0xff]
      %v197 = vld [vmem:[%s1 + $0x90] sm:$0xff]
      %v198 = vld [vmem:[%s1 + $0x98] sm:$0xff]
      %v199 = vld [vmem:[%s1 + $0xa0] sm:$0xff]
      %v200 = vld [vmem:[%s1 + $0xa8] sm:$0xff]
      %v201 = vld [vmem:[%s1 + $0xb0] sm:$0xff]
      %v202 = vld [vmem:[%s1 + $0xb8] sm:$0xff]
      %v203 = vld [vmem:[%s1 + $0xc0] sm:$0xff]
      %v204 = vld [vmem:[%s1 + $0xc8] sm:$0xff]
      %v205 = vld [vmem:[%s1 + $0xd0] sm:$0xff]
      %v206 = vld [vmem:[%s1 + $0xd8] sm:$0xff]
      %v207 = vld [vmem:[%s1 + $0xe0] sm:$0xff]
      %v208 = vld [vmem:[%s1 + $0xe8] sm:$0xff]
      %v209 = vld [vmem:[%s1 + $0xf0] sm:$0xff]
      %v210 = vld [vmem:[%s1 + $0xf8] sm:$0xff]
      %211 = vmatprep.subr.mxu0 %v210
      %212 = vmatpush1.msra.mxu0 %v209
      %213 = vmatprep.subr.mxu0 %v208
      %214 = vmatpush1.msra.mxu0 %v207
      %215 = vmatprep.subr.mxu0 %v206
      %216 = vmatpush1.msra.mxu0 %v205
      %217 = vmatprep.subr.mxu0 %v204
      %218 = vmatpush1.msra.mxu0 %v203
      %219 = vmatprep.subr.mxu0 %v202
      %220 = vmatpush1.msra.mxu0 %v201
      %221 = vmatprep.subr.mxu0 %v200
      %222 = vmatpush1.msra.mxu0 %v199
      %223 = vmatprep.subr.mxu0 %v198
      %224 = vmatpush1.msra.mxu0 %v197
      %225 = vmatprep.subr.mxu0 %v196
      %226 = vmatpush1.msra.mxu0 %v195
      %227 = vmatprep.subr.mxu0 %v194
      %228 = vmatpush1.msra.mxu0 %v193
      %229 = vmatprep.subr.mxu0 %v192
      %230 = vmatpush1.msra.mxu0 %v191
      %231 = vmatprep.subr.mxu0 %v190
      %232 = vmatpush1.msra.mxu0 %v189
      %233 = vmatprep.subr.mxu0 %v188
      %234 = vmatpush1.msra.mxu0 %v187
      %235 = vmatprep.subr.mxu0 %v186
      %236 = vmatpush1.msra.mxu0 %v185
      %237 = vmatprep.subr.mxu0 %v184
      %238 = vmatpush1.msra.mxu0 %v183
      %239 = vmatprep.subr.mxu0 %v182
      %240 = vmatpush1.msra.mxu0 %v181
      %241 = vmatprep.subr.mxu0 %v180
      %242 = vmatpush1.msra.mxu0 %v179
      %243 = vmatprep.subr.mxu0 0.0
      %244 = vmatpush2.msra.mxu0 0.0
      %245 = vmatprep.subr.mxu0 0.0
      %246 = vmatpush2.msra.mxu0 0.0
      %247 = vmatprep.subr.mxu0 0.0
      %248 = vmatpush2.msra.mxu0 0.0
      %249 = vmatprep.subr.mxu0 0.0
      %250 = vmatpush2.msra.mxu0 0.0
      %251 = vmatprep.subr.mxu0 0.0
      %252 = vmatpush2.msra.mxu0 0.0
      %253 = vmatprep.subr.mxu0 0.0
      %254 = vmatpush2.msra.mxu0 0.0
      %255 = vmatprep.subr.mxu0 0.0
      %256 = vmatpush2.msra.mxu0 0.0
      %257 = vmatprep.subr.mxu0 0.0
      %258 = vmatpush2.msra.mxu0 0.0
      %259 = vmatprep.subr.mxu0 0.0
      %260 = vmatpush2.msra.mxu0 0.0
      %261 = vmatprep.subr.mxu0 0.0
      %262 = vmatpush2.msra.mxu0 0.0
      %263 = vmatprep.subr.mxu0 0.0
      %264 = vmatpush2.msra.mxu0 0.0
      %265 = vmatprep.subr.mxu0 0.0
      %266 = vmatpush2.msra.mxu0 0.0
      %267 = vmatprep.subr.mxu0 0.0
      %268 = vmatpush2.msra.mxu0 0.0
      %269 = vmatprep.subr.mxu0 0.0
      %270 = vmatpush2.msra.mxu0 0.0
      %271 = vmatprep.subr.mxu0 0.0
      %272 = vmatpush2.msra.mxu0 0.0
      %273 = vmatprep.subr.mxu0 0.0
      %274 = vmatpush2.msra.mxu0 0.0
      %275 = vmatprep.mubr.f32.mxu0 0.0
      %276 = vmatmul.mubr.f32.gmra.mxu0 %v147
      %v277 = vpop.f32.mrf.mxu0
      %v278 = vadd.f32 0.0, %v277
      %v279 = vpop.f32.mrf.mxu0
      %v280 = vadd.f32 0.0, %v279
      %281 = vmatprep.mubr.f32.mxu0 0.0
      %282 = vmatmul.mubr.f32.gmra.mxu0 %v148
      %v283 = vpop.f32.mrf.mxu0
      %v284 = vadd.f32 0.0, %v283
      %v285 = vpop.f32.mrf.mxu0
      %v286 = vadd.f32 0.0, %v285
      %287 = vmatprep.mubr.f32.mxu0 0.0
      %288 = vmatmul.mubr.f32.gmra.mxu0 %v149
      %v289 = vpop.f32.mrf.mxu0
      %v290 = vadd.f32 0.0, %v289
      %v291 = vpop.f32.mrf.mxu0
      %v292 = vadd.f32 0.0, %v291
      %293 = vmatprep.mubr.f32.mxu0 0.0
      %294 = vmatmul.mubr.f32.gmra.mxu0 %v150
      %v295 = vpop.f32.mrf.mxu0
      %v296 = vadd.f32 0.0, %v295
      %v297 = vpop.f32.mrf.mxu0
      %v298 = vadd.f32 0.0, %v297
      %299 = vmatprep.mubr.f32.mxu0 0.0
      %300 = vmatmul.mubr.f32.gmra.mxu0 %v151
      %v301 = vpop.f32.mrf.mxu0
      %v302 = vadd.f32 0.0, %v301
      %v303 = vpop.f32.mrf.mxu0
      %v304 = vadd.f32 0.0, %v303
      %305 = vmatprep.mubr.f32.mxu0 0.0
      %306 = vmatmul.mubr.f32.gmra.mxu0 %v152
      %v307 = vpop.f32.mrf.mxu0
      %v308 = vadd.f32 0.0, %v307
      %v309 = vpop.f32.mrf.mxu0
      %v310 = vadd.f32 0.0, %v309
      %311 = vmatprep.mubr.f32.mxu0 0.0
      %312 = vmatmul.mubr.f32.gmra.mxu0 %v153
      %v313 = vpop.f32.mrf.mxu0
      %v314 = vadd.f32 0.0, %v313
      %v315 = vpop.f32.mrf.mxu0
      %v316 = vadd.f32 0.0, %v315
      %317 = vmatprep.mubr.f32.mxu0 0.0
      %318 = vmatmul.mubr.f32.gmra.mxu0 %v154
      %v319 = vpop.f32.mrf.mxu0
      %v320 = vadd.f32 0.0, %v319
      %v321 = vpop.f32.mrf.mxu0
      %v322 = vadd.f32 0.0, %v321
      %323 = vmatprep.mubr.f32.mxu0 0.0
      %324 = vmatmul.mubr.f32.gmra.mxu0 %v155
      %v325 = vpop.f32.mrf.mxu0
      %v326 = vadd.f32 0.0, %v325
      %v327 = vpop.f32.mrf.mxu0
      %v328 = vadd.f32 0.0, %v327
      %329 = vmatprep.mubr.f32.mxu0 0.0
      %330 = vmatmul.mubr.f32.gmra.mxu0 %v156
      %v331 = vpop.f32.mrf.mxu0
      %v332 = vadd.f32 0.0, %v331
      %v333 = vpop.f32.mrf.mxu0
      %v334 = vadd.f32 0.0, %v333
      %335 = vmatprep.mubr.f32.mxu0 0.0
      %336 = vmatmul.mubr.f32.gmra.mxu0 %v157
      %v337 = vpop.f32.mrf.mxu0
      %v338 = vadd.f32 0.0, %v337
      %v339 = vpop.f32.mrf.mxu0
      %v340 = vadd.f32 0.0, %v339
      %341 = vmatprep.mubr.f32.mxu0 0.0
      %342 = vmatmul.mubr.f32.gmra.mxu0 %v158
      %v343 = vpop.f32.mrf.mxu0
      %v344 = vadd.f32 0.0, %v343
      %v345 = vpop.f32.mrf.mxu0
      %v346 = vadd.f32 0.0, %v345
      %347 = vmatprep.mubr.f32.mxu0 0.0
      %348 = vmatmul.mubr.f32.gmra.mxu0 %v159
      %v349 = vpop.f32.mrf.mxu0
      %v350 = vadd.f32 0.0, %v349
      %v351 = vpop.f32.mrf.mxu0
      %v352 = vadd.f32 0.0, %v351
      %353 = vmatprep.mubr.f32.mxu0 0.0
      %354 = vmatmul.mubr.f32.gmra.mxu0 %v160
      %v355 = vpop.f32.mrf.mxu0
      %v356 = vadd.f32 0.0, %v355
      %v357 = vpop.f32.mrf.mxu0
      %v358 = vadd.f32 0.0, %v357
      %359 = vmatprep.mubr.f32.mxu0 0.0
      %360 = vmatmul.mubr.f32.gmra.mxu0 %v161
      %v361 = vpop.f32.mrf.mxu0
      %v362 = vadd.f32 0.0, %v361
      %v363 = vpop.f32.mrf.mxu0
      %v364 = vadd.f32 0.0, %v363
      %365 = vmatprep.mubr.f32.mxu0 0.0
      %366 = vmatmul.mubr.f32.gmra.mxu0 %v162
      %v367 = vpop.f32.mrf.mxu0
      %v368 = vadd.f32 0.0, %v367
      %v369 = vpop.f32.mrf.mxu0
      %v370 = vadd.f32 0.0, %v369
      %371 = vmatprep.mubr.f32.mxu0 0.0
      %372 = vmatmul.mubr.f32.gmra.mxu0 %v163
      %v373 = vpop.f32.mrf.mxu0
      %v374 = vadd.f32 0.0, %v373
      %v375 = vpop.f32.mrf.mxu0
      %v376 = vadd.f32 0.0, %v375
      %377 = vmatprep.mubr.f32.mxu0 0.0
      %378 = vmatmul.mubr.f32.gmra.mxu0 %v164
      %v379 = vpop.f32.mrf.mxu0
      %v380 = vadd.f32 0.0, %v379
      %v381 = vpop.f32.mrf.mxu0
      %v382 = vadd.f32 0.0, %v381
      %383 = vmatprep.mubr.f32.mxu0 0.0
      %384 = vmatmul.mubr.f32.gmra.mxu0 %v165
      %v385 = vpop.f32.mrf.mxu0
      %v386 = vadd.f32 0.0, %v385
      %v387 = vpop.f32.mrf.mxu0
      %v388 = vadd.f32 0.0, %v387
      %389 = vmatprep.mubr.f32.mxu0 0.0
      %390 = vmatmul.mubr.f32.gmra.mxu0 %v166
      %v391 = vpop.f32.mrf.mxu0
      %v392 = vadd.f32 0.0, %v391
      %v393 = vpop.f32.mrf.mxu0
      %v394 = vadd.f32 0.0, %v393
      %395 = vmatprep.mubr.f32.mxu0 0.0
      %396 = vmatmul.mubr.f32.gmra.mxu0 %v167
      %v397 = vpop.f32.mrf.mxu0
      %v398 = vadd.f32 0.0, %v397
      %v399 = vpop.f32.mrf.mxu0
      %v400 = vadd.f32 0.0, %v399
      %401 = vmatprep.mubr.f32.mxu0 0.0
      %402 = vmatmul.mubr.f32.gmra.mxu0 %v168
      %v403 = vpop.f32.mrf.mxu0
      %v404 = vadd.f32 0.0, %v403
      %v405 = vpop.f32.mrf.mxu0
      %v406 = vadd.f32 0.0, %v405
      %407 = vmatprep.mubr.f32.mxu0 0.0
      %408 = vmatmul.mubr.f32.gmra.mxu0 %v169
      %v409 = vpop.f32.mrf.mxu0
      %v410 = vadd.f32 0.0, %v409
      %v411 = vpop.f32.mrf.mxu0
      %v412 = vadd.f32 0.0, %v411
      %413 = vmatprep.mubr.f32.mxu0 0.0
      %414 = vmatmul.mubr.f32.gmra.mxu0 %v170
      %v415 = vpop.f32.mrf.mxu0
      %v416 = vadd.f32 0.0, %v415
      %v417 = vpop.f32.mrf.mxu0
      %v418 = vadd.f32 0.0, %v417
      %419 = vmatprep.mubr.f32.mxu0 0.0
      %420 = vmatmul.mubr.f32.gmra.mxu0 %v171
      %v421 = vpop.f32.mrf.mxu0
      %v422 = vadd.f32 0.0, %v421
      %v423 = vpop.f32.mrf.mxu0
      %v424 = vadd.f32 0.0, %v423
      %425 = vmatprep.mubr.f32.mxu0 0.0
      %426 = vmatmul.mubr.f32.gmra.mxu0 %v172
      %v427 = vpop.f32.mrf.mxu0
      %v428 = vadd.f32 0.0, %v427
      %v429 = vpop.f32.mrf.mxu0
      %v430 = vadd.f32 0.0, %v429
      %431 = vmatprep.mubr.f32.mxu0 0.0
      %432 = vmatmul.mubr.f32.gmra.mxu0 %v173
      %v433 = vpop.f32.mrf.mxu0
      %v434 = vadd.f32 0.0, %v433
      %v435 = vpop.f32.mrf.mxu0
      %v436 = vadd.f32 0.0, %v435
      %437 = vmatprep.mubr.f32.mxu0 0.0
      %438 = vmatmul.mubr.f32.gmra.mxu0 %v174
      %v439 = vpop.f32.mrf.mxu0
      %v440 = vadd.f32 0.0, %v439
      %v441 = vpop.f32.mrf.mxu0
      %v442 = vadd.f32 0.0, %v441
      %443 = vmatprep.mubr.f32.mxu0 0.0
      %444 = vmatmul.mubr.f32.gmra.mxu0 %v175
      %v445 = vpop.f32.mrf.mxu0
      %v446 = vadd.f32 0.0, %v445
      %v447 = vpop.f32.mrf.mxu0
      %v448 = vadd.f32 0.0, %v447
      %449 = vmatprep.mubr.f32.mxu0 0.0
      %450 = vmatmul.mubr.f32.gmra.mxu0 %v176
      %v451 = vpop.f32.mrf.mxu0
      %v452 = vadd.f32 0.0, %v451
      %v453 = vpop.f32.mrf.mxu0
      %v454 = vadd.f32 0.0, %v453
      %455 = vmatprep.mubr.f32.mxu0 0.0
      %456 = vmatmul.mubr.f32.gmra.mxu0 %v177
      %v457 = vpop.f32.mrf.mxu0
      %v458 = vadd.f32 0.0, %v457
      %v459 = vpop.f32.mrf.mxu0
      %v460 = vadd.f32 0.0, %v459
      %461 = vmatprep.mubr.f32.mxu0 0.0
      %462 = vmatmul.mubr.f32.gmra.mxu0 %v178
      %v463 = vpop.f32.mrf.mxu0
      %v464 = vadd.f32 0.0, %v463
      %v465 = vpop.f32.mrf.mxu0
      %v466 = vadd.f32 0.0, %v465
      %467 = vdwg.mxu0
      %v468 = vmax.f32 %v278, 0.0
      %v469 = vmax.f32 %v284, 0.0
      %v470 = vmax.f32 %v290, 0.0
      %v471 = vmax.f32 %v296, 0.0
      %v472 = vmax.f32 %v302, 0.0
      %v473 = vmax.f32 %v308, 0.0
      %v474 = vmax.f32 %v314, 0.0
      %v475 = vmax.f32 %v320, 0.0
      %v476 = vmax.f32 %v326, 0.0
      %v477 = vmax.f32 %v332, 0.0
      %v478 = vmax.f32 %v338, 0.0
      %v479 = vmax.f32 %v344, 0.0
      %v480 = vmax.f32 %v350, 0.0
      %v481 = vmax.f32 %v356, 0.0
      %v482 = vmax.f32 %v362, 0.0
      %v483 = vmax.f32 %v368, 0.0
      %v484 = vmax.f32 %v374, 0.0
      %v485 = vmax.f32 %v380, 0.0
      %v486 = vmax.f32 %v386, 0.0
      %v487 = vmax.f32 %v392, 0.0
      %v488 = vmax.f32 %v398, 0.0
      %v489 = vmax.f32 %v404, 0.0
      %v490 = vmax.f32 %v410, 0.0
      %v491 = vmax.f32 %v416, 0.0
      %v492 = vmax.f32 %v422, 0.0
      %v493 = vmax.f32 %v428, 0.0
      %v494 = vmax.f32 %v434, 0.0
      %v495 = vmax.f32 %v440, 0.0
      %v496 = vmax.f32 %v446, 0.0
      %v497 = vmax.f32 %v452, 0.0
      %v498 = vmax.f32 %v458, 0.0
      %v499 = vmax.f32 %v464, 0.0
      %v500 = vmax.f32 %v280, 0.0
      %v501 = vmax.f32 %v286, 0.0
      %v502 = vmax.f32 %v292, 0.0
      %v503 = vmax.f32 %v298, 0.0
      %v504 = vmax.f32 %v304, 0.0
      %v505 = vmax.f32 %v310, 0.0
      %v506 = vmax.f32 %v316, 0.0
      %v507 = vmax.f32 %v322, 0.0
      %v508 = vmax.f32 %v328, 0.0
      %v509 = vmax.f32 %v334, 0.0
      %v510 = vmax.f32 %v340, 0.0
      %v511 = vmax.f32 %v346, 0.0
      %v512 = vmax.f32 %v352, 0.0
      %v513 = vmax.f32 %v358, 0.0
      %v514 = vmax.f32 %v364, 0.0
      %v515 = vmax.f32 %v370, 0.0
      %v516 = vmax.f32 %v376, 0.0
      %v517 = vmax.f32 %v382, 0.0
      %v518 = vmax.f32 %v388, 0.0
      %v519 = vmax.f32 %v394, 0.0
      %v520 = vmax.f32 %v400, 0.0
      %v521 = vmax.f32 %v406, 0.0
      %v522 = vmax.f32 %v412, 0.0
      %v523 = vmax.f32 %v418, 0.0
      %v524 = vmax.f32 %v424, 0.0
      %v525 = vmax.f32 %v430, 0.0
      %v526 = vmax.f32 %v436, 0.0
      %v527 = vmax.f32 %v442, 0.0
      %v528 = vmax.f32 %v448, 0.0
      %v529 = vmax.f32 %v454, 0.0
      %v530 = vmax.f32 %v460, 0.0
      %v531 = vmax.f32 %v466, 0.0
      %v532 = vadd.f32 %v468, %v500
      %v533 = vadd.f32 %v469, %v501
      %v534 = vadd.f32 %v470, %v502
      %v535 = vadd.f32 %v471, %v503
      %v536 = vadd.f32 %v472, %v504
      %v537 = vadd.f32 %v473, %v505
      %v538 = vadd.f32 %v474, %v506
      %v539 = vadd.f32 %v475, %v507
      %v540 = vadd.f32 %v476, %v508
      %v541 = vadd.f32 %v477, %v509
      %v542 = vadd.f32 %v478, %v510
      %v543 = vadd.f32 %v479, %v511
      %v544 = vadd.f32 %v480, %v512
      %v545 = vadd.f32 %v481, %v513
      %v546 = vadd.f32 %v482, %v514
      %v547 = vadd.f32 %v483, %v515
      %v548 = vadd.f32 %v484, %v516
      %v549 = vadd.f32 %v485, %v517
      %v550 = vadd.f32 %v486, %v518
      %v551 = vadd.f32 %v487, %v519
      %v552 = vadd.f32 %v488, %v520
      %v553 = vadd.f32 %v489, %v521
      %v554 = vadd.f32 %v490, %v522
      %v555 = vadd.f32 %v491, %v523
      %v556 = vadd.f32 %v492, %v524
      %v557 = vadd.f32 %v493, %v525
      %v558 = vadd.f32 %v494, %v526
      %v559 = vadd.f32 %v495, %v527
      %v560 = vadd.f32 %v496, %v528
      %v561 = vadd.f32 %v497, %v529
      %v562 = vadd.f32 %v498, %v530
      %v563 = vadd.f32 %v499, %v531
      %564 = vst [vmem:[%s145] sm:$0xff] %v532
      %565 = vst [vmem:[%s145 + $0x8] sm:$0xff] %v533
      %566 = vst [vmem:[%s145 + $0x10] sm:$0xff] %v534
      %567 = vst [vmem:[%s145 + $0x18] sm:$0xff] %v535
      %568 = vst [vmem:[%s145 + $0x20] sm:$0xff] %v536
      %569 = vst [vmem:[%s145 + $0x28] sm:$0xff] %v537
      %570 = vst [vmem:[%s145 + $0x30] sm:$0xff] %v538
      %571 = vst [vmem:[%s145 + $0x38] sm:$0xff] %v539
      %572 = vst [vmem:[%s145 + $0x40] sm:$0xff] %v540
      %573 = vst [vmem:[%s145 + $0x48] sm:$0xff] %v541
      %574 = vst [vmem:[%s145 + $0x50] sm:$0xff] %v542
      %575 = vst [vmem:[%s145 + $0x58] sm:$0xff] %v543
      %576 = vst [vmem:[%s145 + $0x60] sm:$0xff] %v544
      %577 = vst [vmem:[%s145 + $0x68] sm:$0xff] %v545
      %578 = vst [vmem:[%s145 + $0x70] sm:$0xff] %v546
      %579 = vst [vmem:[%s145 + $0x78] sm:$0xff] %v547
      %580 = vst [vmem:[%s145 + $0x80] sm:$0xff] %v548
      %581 = vst [vmem:[%s145 + $0x88] sm:$0xff] %v549
      %582 = vst [vmem:[%s145 + $0x90] sm:$0xff] %v550
      %583 = vst [vmem:[%s145 + $0x98] sm:$0xff] %v551
      %584 = vst [vmem:[%s145 + $0xa0] sm:$0xff] %v552
      %585 = vst [vmem:[%s145 + $0xa8] sm:$0xff] %v553
      %586 = vst [vmem:[%s145 + $0xb0] sm:$0xff] %v554
      %587 = vst [vmem:[%s145 + $0xb8] sm:$0xff] %v555
      %588 = vst [vmem:[%s145 + $0xc0] sm:$0xff] %v556
      %589 = vst [vmem:[%s145 + $0xc8] sm:$0xff] %v557
      %590 = vst [vmem:[%s145 + $0xd0] sm:$0xff] %v558
      %591 = vst [vmem:[%s145 + $0xd8] sm:$0xff] %v559
      %592 = vst [vmem:[%s145 + $0xe0] sm:$0xff] %v560
      %593 = vst [vmem:[%s145 + $0xe8] sm:$0xff] %v561
      %594 = vst [vmem:[%s145 + $0xf0] sm:$0xff] %v562
      %595 = vst [vmem:[%s145 + $0xf8] sm:$0xff] %v563
      %s596 = smul.u32 32, %s13
      %p597 = scmp.lt.s32.totalorder %s596, 63
      %s598 = scalar_select %p597, %s596, 63
      %s599 = smul.addr %s598, 8
      %s600 = scalar_lea.vmem %s2, %s599
      // Predicated region
      $region29: #{feedforward_pallas.1} parent=27 // pred_check
        %p601 = pneg %p78
      $region30: #{feedforward_pallas.1} parent=27 // pred_check_branch
        %603 = sbr.rel (%p601) target = $region32
      $region31: #{feedforward_pallas.1} parent=27 // pred_region
        %s604 = smul.u32 32, %s13
      $region32: #{feedforward_pallas.1} parent=27 // pred_fallthru
        _
    $region28: #{feedforward_pallas.1} parent=5 // pred_fallthru
      _
    %p605 = scmp.le.s32.totalorder 2, %s8
    // Predicated region
    $region33: #{feedforward_pallas.1} parent=5 // pred_check
      %p606 = pneg %p605
    $region34: #{feedforward_pallas.1} parent=5 // pred_check_branch
      %608 = sbr.rel (%p606) target = $region36
    $region35: #{feedforward_pallas.1} parent=5 // pred_region
      %s609 = ssub.s32 %s8, 2
      // Predicated region
      $region37: #{feedforward_pallas.1} parent=35 // pred_check
        %p610 = pneg %p84
      $region38: #{feedforward_pallas.1} parent=35 // pred_check_branch
        %612 = sbr.rel (%p610) target = $region40
      $region39: #{feedforward_pallas.1} parent=35 // pred_region
        %s613 = smul.u32 32, %s14
        %p614 = scmp.lt.s32.totalorder %s613, 63
        %s615 = scalar_select %p614, %s613, 63
        %s616 = smul.addr %s615, 8
        %s617 = scalar_lea.vmem %s2, %s616
      $region40: #{feedforward_pallas.1} parent=35 // pred_fallthru
        _
    $region36: #{feedforward_pallas.1} parent=5 // pred_fallthru
      _
  $region6: #{feedforward_pallas.1} parent=0 // loop_footer
    %s12 = sadd.s32 1, %s8
  $region7: #{feedforward_pallas.1} parent=0 // loop_footer_branch
    %7 = sbr.rel target = $region3
  $region8: #{feedforward_pallas.1} parent=0 // loop_exit
    _

</llo_original>
